<compile_context>
chip_gen: v7x
topology: tpu7x:2x2x1
jax: 0.10.0
libtpu: 0.0.40
codegen_flags: <defaults>
</compile_context>

<pallas_src>
import jax
import jax.numpy as jnp
from jax.experimental import pallas as pl
from jax.experimental.pallas import tpu as pltpu

LANE = 128  # TPU lane width; hidden/output feature dims are padded to a multiple of this.


def _round_up(n, m):
    return ((n + m - 1) // m) * m


def _mlp_head_kernel(x_ref, w1_ref, b1_ref, w2_ref, b2_ref, o_ref):
    """Fused head for one batch tile: out = relu(x @ W1 + b1) @ W2 + b2.

    x arrives in its stored dtype (fp32) and is cast to bf16 in-kernel (VPU) for the MXU;
    W1 / W2 are bf16, accumulation and biases are fp32.  Hidden/output tiles are
    128-lane wide so the output store is lane-dense and unmasked.
    """
    x = x_ref[...].astype(jnp.bfloat16)                          # (tb, d_in) in-kernel cast
    h = jnp.dot(x, w1_ref[...], preferred_element_type=jnp.float32)
    h = jnp.maximum(h + b1_ref[...], 0.0)                        # fp32 bias + ReLU (VPU)
    o = jnp.dot(h.astype(jnp.bfloat16), w2_ref[...],
                preferred_element_type=jnp.float32)
    o_ref[...] = (o + b2_ref[...]).astype(o_ref.dtype)           # lane-dense (tb, 128) store


def mlp_head_pallas(x, w1p, b1p, w2p, b2p, *, d_out, block_b=512,
                    out_dtype=jnp.float32):
    """Run the fused head over a batched grid.

    x    : (B, d_in) fp32 (or bf16) activations — passed to the kernel unpadded/uncast.
    w1p  : (d_in, Hp) bf16, hidden dim zero-padded to a 128 multiple.
    b1p  : (1,  Hp)   fp32, zero-padded.
    w2p  : (Hp, Op)   bf16, zero-padded.
    b2p  : (1,  Op)   fp32, zero-padded.
    Returns (B, d_out) in out_dtype.
    """
    batch, d_in = x.shape
    d_in_w, d_hid_p = w1p.shape
    assert d_in_w == d_in, (d_in_w, d_in)
    d_out_p = w2p.shape[1]

    # Adaptive batch tile: big enough to amortize per-grid-step overhead, but never a
    # full 512-row tile for a tiny batch.  Ragged last block is handled by Pallas
    # (OOB reads feed rows that are sliced off; OOB writes are masked).
    tb = max(8, min(block_b, _round_up(batch, 8)))
    n_tiles = pl.cdiv(batch, tb)

    cost = pl.CostEstimate(
        flops=2 * batch * (d_in * d_hid_p + d_hid_p * d_out_p),
        transcendentals=0,
        bytes_accessed=(x.size * x.dtype.itemsize
                        + w1p.size * 2 + w2p.size * 2
                        + b1p.size * 4 + b2p.size * 4
                        + batch * d_out_p * jnp.dtype(out_dtype).itemsize),
    )

    out_p = pl.pallas_call(
        _mlp_head_kernel,
        out_shape=jax.ShapeDtypeStruct((batch, d_out_p), out_dtype),
        grid_spec=pl.GridSpec(
            grid=(n_tiles,),
            in_specs=[
                # Activations stream with the batch-tile index; last dim == full d_in.
                pl.BlockSpec((tb, d_in), lambda i: (i, 0)),
                # Weights / biases stay resident in VMEM across all batch tiles.
                pl.BlockSpec((d_in, d_hid_p), lambda i: (0, 0)),
                pl.BlockSpec((1, d_hid_p), lambda i: (0, 0)),
                pl.BlockSpec((d_hid_p, d_out_p), lambda i: (0, 0)),
                pl.BlockSpec((1, d_out_p), lambda i: (0, 0)),
            ],
            out_specs=pl.BlockSpec((tb, d_out_p), lambda i: (i, 0)),
        ),
        compiler_params=pltpu.CompilerParams(
            dimension_semantics=("parallel",),     # batch tiles shard across TCs on v7x
            vmem_limit_bytes=32 * 1024 * 1024,     # safe on v5e/v6e/v7x; usage << 2 MiB
        ),
        cost_estimate=cost,
    )(x, w1p, b1p, w2p, b2p)

    # Strip the padded output lanes outside the kernel (logical width d_out).
    return out_p[:, :d_out]


class WrappedPredictionHead:
    """Deterministic stand-in for the model that ATLASPredictor wraps."""

    def __init__(self, d_in=32, d_hidden=64, d_out=8, seed=0, block_b=512):
        key = jax.random.PRNGKey(seed)
        k1, k2 = jax.random.split(key)
        self.d_in, self.d_hidden, self.d_out = d_in, d_hidden, d_out
        self.block_b = block_b

        # Logical (unpadded, fp32) parameters — what a checkpoint would hold.
        self.w1 = (jax.random.normal(k1, (d_in, d_hidden), jnp.float32)
                   * (1.0 / jnp.sqrt(d_in)))
        self.b1 = jnp.zeros((1, d_hidden), jnp.float32)
        self.w2 = (jax.random.normal(k2, (d_hidden, d_out), jnp.float32)
                   * (1.0 / jnp.sqrt(d_hidden)))
        self.b2 = jnp.zeros((1, d_out), jnp.float32)

        # Kernel-side parameters: d_in is left at its natural width (streamed per tile);
        # hidden / output widths are zero-padded to 128 lanes, weights in bf16.
        # NOTE: padded weight columns and bias lanes must stay exactly zero so the padded
        # hidden/output lanes remain zero through relu and the second matmul.
        hp = _round_up(d_hidden, LANE)
        op = _round_up(d_out, LANE)
        self.w1p = (jnp.zeros((d_in, hp), jnp.bfloat16)
                    .at[:, :d_hidden].set(self.w1.astype(jnp.bfloat16)))
        self.b1p = jnp.zeros((1, hp), jnp.float32).at[:, :d_hidden].set(self.b1)
        self.w2p = (jnp.zeros((hp, op), jnp.bfloat16)
                    .at[:d_hidden, :d_out].set(self.w2.astype(jnp.bfloat16)))
        self.b2p = jnp.zeros((1, op), jnp.float32).at[:, :d_out].set(self.b2)

    def __call__(self, x):
        return mlp_head_pallas(x, self.w1p, self.b1p, self.w2p, self.b2p,
                               d_out=self.d_out, block_b=self.block_b)


class ATLASPredictor:
    """JAX/Pallas mirror of the PyTorch stub: pure delegation to self.model."""

    def __init__(self, model=None):
        self.model = model

    def __call__(self, *args, **kwargs):
        if self.model is None:
            raise RuntimeError('ATLASPredictor missing wrapped model')
        return self.model(*args, **kwargs)


if __name__ == "__main__":
    key = jax.random.PRNGKey(0)
    batch, d_in = 300, 32            # non-multiple of 8: exercises the ragged last block
    x = jax.random.normal(key, (batch, d_in), jnp.float32)

    predictor = ATLASPredictor(model=WrappedPredictionHead(d_in=d_in))
    out = jax.block_until_ready(predictor(x))
    assert out.shape == (batch, 8)

    m = predictor.model

    # Reference mirroring the kernel's bf16-input / fp32-accumulate arithmetic.
    xb = x.astype(jnp.bfloat16).astype(jnp.float32)
    w1b = m.w1.astype(jnp.bfloat16).astype(jnp.float32)
    w2b = m.w2.astype(jnp.bfloat16).astype(jnp.float32)
    h_ref = jnp.maximum(xb @ w1b + m.b1, 0.0)
    ref = h_ref.astype(jnp.bfloat16).astype(jnp.float32) @ w2b + m.b2
    assert jnp.allclose(out, ref, atol=5e-3, rtol=5e-3), \
        float(jnp.max(jnp.abs(out - ref)))

    # End-to-end vs. full-fp32 math (loose tolerance for bf16 MXU inputs).
    ref32 = jnp.maximum(x @ m.w1 + m.b1, 0.0) @ m.w2 + m.b2
    assert jnp.allclose(out, ref32, atol=5e-2, rtol=5e-2)

    # A tiny batch takes the adaptive-tile path (tb=8) and still works.
    x_small = jax.random.normal(jax.random.PRNGKey(1), (8, d_in), jnp.float32)
    out_small = jax.block_until_ready(predictor(x_small))
    assert out_small.shape == (8, 8)
    ref_small = jnp.maximum(x_small @ m.w1 + m.b1, 0.0) @ m.w2 + m.b2
    assert jnp.allclose(out_small, ref_small, atol=5e-2, rtol=5e-2)

    # The no-model path must raise, matching the PyTorch stub semantics.
    try:
        ATLASPredictor()(x)
        raise AssertionError("expected RuntimeError for missing wrapped model")
    except RuntimeError:
        pass

    print("KERNEL_OK")
</pallas_src>

<mosaic_0001>
module attributes {stable_mosaic.version = 11 : i64} {
  func.func @_mlp_head_kernel(%arg0: i32, %arg1: memref<304x32xf32, #tpu.memory_space<vmem>>, %arg2: memref<32x128xbf16, #tpu.memory_space<vmem>>, %arg3: memref<1x128xf32, #tpu.memory_space<vmem>>, %arg4: memref<128x128xbf16, #tpu.memory_space<vmem>>, %arg5: memref<1x128xf32, #tpu.memory_space<vmem>>, %arg6: memref<304x128xf32, #tpu.memory_space<vmem>>) attributes {dimension_semantics = [#tpu.dimension_semantics<parallel>], iteration_bounds = array<i64: 1>, scalar_prefetch = 0 : i64, scratch_operands = 0 : i64, tpu.core_type = #tpu.core_type<tc>, window_params = [{transform_indices = @transform_0, window_bounds = array<i64: 304, 32>}, {pipeline_mode = #tpu.pipeline_mode<synchronous>, transform_indices = @transform_1, window_bounds = array<i64: 32, 128>}, {pipeline_mode = #tpu.pipeline_mode<synchronous>, transform_indices = @transform_2, window_bounds = array<i64: 1, 128>}, {pipeline_mode = #tpu.pipeline_mode<synchronous>, transform_indices = @transform_3, window_bounds = array<i64: 128, 128>}, {pipeline_mode = #tpu.pipeline_mode<synchronous>, transform_indices = @transform_4, window_bounds = array<i64: 1, 128>}, {transform_indices = @transform_5, window_bounds = array<i64: 304, 128>}]} {
    %c0 = arith.constant 0 : index
    %c0_0 = arith.constant 0 : index
    %0 = vector.load %arg1[%c0, %c0_0] : memref<304x32xf32, #tpu.memory_space<vmem>>, vector<304x32xf32>
    %1 = arith.truncf %0 : vector<304x32xf32> to vector<304x32xbf16>
    %c0_1 = arith.constant 0 : index
    %c0_2 = arith.constant 0 : index
    %2 = vector.load %arg2[%c0_1, %c0_2] : memref<32x128xbf16, #tpu.memory_space<vmem>>, vector<32x128xbf16>
    %cst = arith.constant dense<0.000000e+00> : vector<304x128xf32>
    %3 = tpu.matmul %1, %2, %cst {dimension_numbers = #tpu.dot_dimension_numbers<[1], [0], [0], [1], [0, 0, 1, 1], [], []>} : vector<304x32xbf16>, vector<32x128xbf16>, vector<304x128xf32> -> vector<304x128xf32>
    %c0_3 = arith.constant 0 : index
    %c0_4 = arith.constant 0 : index
    %4 = vector.load %arg3[%c0_3, %c0_4] : memref<1x128xf32, #tpu.memory_space<vmem>>, vector<1x128xf32>
    %5 = vector.broadcast %4 : vector<1x128xf32> to vector<304x128xf32>
    %6 = arith.addf %3, %5 : vector<304x128xf32>
    %cst_5 = arith.constant 0.000000e+00 : f32
    %7 = vector.broadcast %cst_5 : f32 to vector<304x128xf32>
    %8 = arith.maximumf %6, %7 : vector<304x128xf32>
    %9 = arith.truncf %8 : vector<304x128xf32> to vector<304x128xbf16>
    %c0_6 = arith.constant 0 : index
    %c0_7 = arith.constant 0 : index
    %10 = vector.load %arg4[%c0_6, %c0_7] : memref<128x128xbf16, #tpu.memory_space<vmem>>, vector<128x128xbf16>
    %cst_8 = arith.constant dense<0.000000e+00> : vector<304x128xf32>
    %11 = tpu.matmul %9, %10, %cst_8 {dimension_numbers = #tpu.dot_dimension_numbers<[1], [0], [0], [1], [0, 0, 1, 1], [], []>} : vector<304x128xbf16>, vector<128x128xbf16>, vector<304x128xf32> -> vector<304x128xf32>
    %c0_9 = arith.constant 0 : index
    %c0_10 = arith.constant 0 : index
    %12 = vector.load %arg5[%c0_9, %c0_10] : memref<1x128xf32, #tpu.memory_space<vmem>>, vector<1x128xf32>
    %13 = vector.broadcast %12 : vector<1x128xf32> to vector<304x128xf32>
    %14 = arith.addf %11, %13 : vector<304x128xf32>
    %c0_11 = arith.constant 0 : index
    %c0_12 = arith.constant 0 : index
    %15 = vector.load %arg6[%c0_11, %c0_12] : memref<304x128xf32, #tpu.memory_space<vmem>>, vector<304x128xf32>
    tpu.vector_store %arg6[%c0_11, %c0_12], %14 {strides = array<i32>} : memref<304x128xf32, #tpu.memory_space<vmem>>, vector<304x128xf32>,
    return
  }
  func.func @transform_0(%arg0: i32) -> (i32, i32) {
    %c0_i32 = arith.constant 0 : i32
    %c0_i32_0 = arith.constant 0 : i32
    return %arg0, %c0_i32 : i32, i32
  }
  func.func @transform_1(%arg0: i32) -> (i32, i32) {
    %c0_i32 = arith.constant 0 : i32
    %c0_i32_0 = arith.constant 0 : i32
    %c0_i32_1 = arith.constant 0 : i32
    return %c0_i32, %c0_i32_0 : i32, i32
  }
  func.func @transform_2(%arg0: i32) -> (i32, i32) {
    %c0_i32 = arith.constant 0 : i32
    %c0_i32_0 = arith.constant 0 : i32
    %c0_i32_1 = arith.constant 0 : i32
    return %c0_i32, %c0_i32_0 : i32, i32
  }
  func.func @transform_3(%arg0: i32) -> (i32, i32) {
    %c0_i32 = arith.constant 0 : i32
    %c0_i32_0 = arith.constant 0 : i32
    %c0_i32_1 = arith.constant 0 : i32
    return %c0_i32, %c0_i32_0 : i32, i32
  }
  func.func @transform_4(%arg0: i32) -> (i32, i32) {
    %c0_i32 = arith.constant 0 : i32
    %c0_i32_0 = arith.constant 0 : i32
    %c0_i32_1 = arith.constant 0 : i32
    return %c0_i32, %c0_i32_0 : i32, i32
  }
  func.func @transform_5(%arg0: i32) -> (i32, i32) {
    %c0_i32 = arith.constant 0 : i32
    %c0_i32_0 = arith.constant 0 : i32
    return %arg0, %c0_i32 : i32, i32
  }
}

</mosaic_0001>

<llo_original>
// kernel: tpu_custom_call.1
$region0: #{tpu_custom_call.1}
  #allocation0 [shape = 'u32[]', space=smem, size = 0x4, offset = 0x4, fixed_abs, tag = 'smem constant byte address 0x4 - core index']
  #allocation1 [shape = 'u32[144,128]{1,0:T(1,128)}', space=vmem, size = 0x12000, scoped, tag = 'internal scratch']
  %s0 = inlined_call_operand.vmem [shape: f32[300,32], index: 0, kind: input, shape index: {}]
  %s1 = inlined_call_operand.vmem [shape: bf16[32,128], index: 1, kind: input, shape index: {}]
  %s2 = inlined_call_operand.vmem [shape: f32[1,128], index: 2, kind: input, shape index: {}]
  %s3 = inlined_call_operand.vmem [shape: bf16[128,128], index: 3, kind: input, shape index: {}]
  %s4 = inlined_call_operand.vmem [shape: f32[1,128], index: 4, kind: input, shape index: {}]
  %s5 = inlined_call_operand.hbm [shape: f32[300,128], index: 5, kind: output, shape index: {}]
  %s6 = sld [smem:[#allocation0]]
  $region30: #{tpu_custom_call.1} parent=0
    _
  %s8 = ssub.s32 1, %s6
  %s9 = scalar_select 0, %s8, %s6
  $region1: #{tpu_custom_call.1} parent=0
    #allocation2 [shape = 'u8[155648]{0}', space=vmem, size = 0x26000, scoped, tag = 'output window, operand 0, single buffered']
    #allocation3 [shape = 's32[1]{0}', space=sflag, size = 0x4, scoped, tag = 'scoped memory for tpu_custom_call.1']
    %10 = vsyncpa [#allocation3], 0
    // Predicated region
    $region2: #{tpu_custom_call.1} parent=1 // pred_check
      _
    $region3: #{tpu_custom_call.1} parent=1 // pred_check_branch
      %12 = sbr.rel (0) target = $region5
    $region4: #{tpu_custom_call.1} parent=1 // pred_region
      _
    $region5: #{tpu_custom_call.1} parent=1 // pred_fallthru
      _
    // Predicated region
    $region6: #{tpu_custom_call.1} parent=1 // pred_check
      _
    $region7: #{tpu_custom_call.1} parent=1 // pred_check_branch
      %14 = sbr.rel (0) target = $region9
    $region8: #{tpu_custom_call.1} parent=1 // pred_region
      _
    $region9: #{tpu_custom_call.1} parent=1 // pred_fallthru
      _
    // Predicated region
    $region10: #{tpu_custom_call.1} parent=1 // pred_check
      _
    $region11: #{tpu_custom_call.1} parent=1 // pred_check_branch
      %16 = sbr.rel (0) target = $region13
    $region12: #{tpu_custom_call.1} parent=1 // pred_region
      _
    $region13: #{tpu_custom_call.1} parent=1 // pred_fallthru
      _
    // Predicated region
    $region14: #{tpu_custom_call.1} parent=1 // pred_check
      _
    $region15: #{tpu_custom_call.1} parent=1 // pred_check_branch
      %18 = sbr.rel (0) target = $region17
    $region16: #{tpu_custom_call.1} parent=1 // pred_region
      _
    $region17: #{tpu_custom_call.1} parent=1 // pred_fallthru
      _
    // Predicated region
    $region18: #{tpu_custom_call.1} parent=1 // pred_check
      _
    $region19: #{tpu_custom_call.1} parent=1 // pred_check_branch
      %20 = sbr.rel (0) target = $region21
    $region20: #{tpu_custom_call.1} parent=1 // pred_region
      _
    $region21: #{tpu_custom_call.1} parent=1 // pred_fallthru
      _
    %v22 = vld [vmem:[%s0] sm:$0xff]
    %v23 = vld [vmem:[%s0 + $0x8] sm:$0xff]
    %v24 = vld [vmem:[%s0 + $0x10] sm:$0xff]
    %v25 = vld [vmem:[%s0 + $0x18] sm:$0xff]
    %v26 = vld [vmem:[%s0 + $0x20] sm:$0xff]
    %v27 = vld [vmem:[%s0 + $0x28] sm:$0xff]
    %v28 = vld [vmem:[%s0 + $0x30] sm:$0xff]
    %v29 = vld [vmem:[%s0 + $0x38] sm:$0xff]
    %v30 = vld [vmem:[%s0 + $0x40] sm:$0xff]
    %v31 = vld [vmem:[%s0 + $0x48] sm:$0xff]
    %v32 = vld [vmem:[%s0 + $0x50] sm:$0xff]
    %v33 = vld [vmem:[%s0 + $0x58] sm:$0xff]
    %v34 = vld [vmem:[%s0 + $0x60] sm:$0xff]
    %v35 = vld [vmem:[%s0 + $0x68] sm:$0xff]
    %v36 = vld [vmem:[%s0 + $0x70] sm:$0xff]
    %v37 = vld [vmem:[%s0 + $0x78] sm:$0xff]
    %v38 = vld [vmem:[%s0 + $0x80] sm:$0xff]
    %v39 = vld [vmem:[%s0 + $0x88] sm:$0xff]
    %v40 = vld [vmem:[%s0 + $0x90] sm:$0xff]
    %v41 = vld [vmem:[%s0 + $0x98] sm:$0xff]
    %v42 = vld [vmem:[%s0 + $0xa0] sm:$0xff]
    %v43 = vld [vmem:[%s0 + $0xa8] sm:$0xff]
    %v44 = vld [vmem:[%s0 + $0xb0] sm:$0xff]
    %v45 = vld [vmem:[%s0 + $0xb8] sm:$0xff]
    %v46 = vld [vmem:[%s0 + $0xc0] sm:$0xff]
    %v47 = vld [vmem:[%s0 + $0xc8] sm:$0xff]
    %v48 = vld [vmem:[%s0 + $0xd0] sm:$0xff]
    %v49 = vld [vmem:[%s0 + $0xd8] sm:$0xff]
    %v50 = vld [vmem:[%s0 + $0xe0] sm:$0xff]
    %v51 = vld [vmem:[%s0 + $0xe8] sm:$0xff]
    %v52 = vld [vmem:[%s0 + $0xf0] sm:$0xff]
    %v53 = vld [vmem:[%s0 + $0xf8] sm:$0xff]
    %v54 = vld [vmem:[%s0 + $0x100] sm:$0xff]
    %v55 = vld [vmem:[%s0 + $0x108] sm:$0xff]
    %v56 = vld [vmem:[%s0 + $0x110] sm:$0xff]
    %v57 = vld [vmem:[%s0 + $0x118] sm:$0xff]
    %v58 = vld [vmem:[%s0 + $0x120] sm:$0xff]
    %v59 = vld [vmem:[%s0 + $0x128] sm:$0xff]
    %v60 = vpack.c.bf16 %v23, %v22
    %v61 = vpack.c.bf16 %v25, %v24
    %v62 = vpack.c.bf16 %v27, %v26
    %v63 = vpack.c.bf16 %v29, %v28
    %v64 = vpack.c.bf16 %v31, %v30
    %v65 = vpack.c.bf16 %v33, %v32
    %v66 = vpack.c.bf16 %v35, %v34
    %v67 = vpack.c.bf16 %v37, %v36
    %v68 = vpack.c.bf16 %v39, %v38
    %v69 = vpack.c.bf16 %v41, %v40
    %v70 = vpack.c.bf16 %v43, %v42
    %v71 = vpack.c.bf16 %v45, %v44
    %v72 = vpack.c.bf16 %v47, %v46
    %v73 = vpack.c.bf16 %v49, %v48
    %v74 = vpack.c.bf16 %v51, %v50
    %v75 = vpack.c.bf16 %v53, %v52
    %v76 = vpack.c.bf16 %v55, %v54
    %v77 = vpack.c.bf16 %v57, %v56
    %v78 = vpack.c.bf16 %v59, %v58
    %v79 = vld [vmem:[%s1] sm:$0xf]
    %v80 = vld [vmem:[%s1 + $0x4] sm:$0xf]
    %v81 = vld [vmem:[%s1 + $0x8] sm:$0xf]
    %v82 = vld [vmem:[%s1 + $0xc] sm:$0xf]
    %v83 = vld [vmem:[%s2] sm:$0x1]
    %v85 = vlaneseq
    %v86 = vshrl.u32 %v85, 7
    %v87 = vsub.s32 0, %v86
    %v88 = vrot.slane %v83, %v87
    %v94 = vunpack.c.l.b16 %v79
    %v95 = vunpack.c.l.b16 %v80
    %v96 = vunpack.c.l.b16 %v81
    %v97 = vunpack.c.l.b16 %v82
    %v98 = vpack.c.b16 %v95, %v94
    %v99 = vpack.c.b16 %v97, %v96
    %vm102 = vcmask 261120
    %v104 = vsel %vm102, %v60, 0
    %v107 = vsel %vm102, %v61, 0
    %v110 = vsel %vm102, %v62, 0
    %v113 = vsel %vm102, %v63, 0
    %v116 = vsel %vm102, %v64, 0
    %v119 = vsel %vm102, %v65, 0
    %v122 = vsel %vm102, %v66, 0
    %v125 = vsel %vm102, %v67, 0
    %v128 = vsel %vm102, %v68, 0
    %v131 = vsel %vm102, %v69, 0
    %v134 = vsel %vm102, %v70, 0
    %v137 = vsel %vm102, %v71, 0
    %v140 = vsel %vm102, %v72, 0
    %v143 = vsel %vm102, %v73, 0
    %v146 = vsel %vm102, %v74, 0
    %v149 = vsel %vm102, %v75, 0
    %v152 = vsel %vm102, %v76, 0
    %v155 = vsel %vm102, %v77, 0
    %v158 = vsel %vm102, %v78, 0
    %160 = vmatprep.subr.bf16.mxu0 0
    %161 = vmatpush1.bf16.msra.mxu0 %v98
    %162 = vmatprep.subr.bf16.mxu0 0
    %163 = vmatpush1.bf16.msra.mxu0 %v99
    %164 = vmatprep.subr.bf16.mxu0 0
    %165 = vmatpush1.bf16.msra.mxu0 0
    %166 = vmatprep.subr.bf16.mxu0 0
    %167 = vmatpush1.bf16.msra.mxu0 0
    %168 = vmatprep.subr.bf16.mxu0 0
    %169 = vmatpush1.bf16.msra.mxu0 0
    %170 = vmatprep.subr.bf16.mxu0 0
    %171 = vmatpush1.bf16.msra.mxu0 0
    %172 = vmatprep.subr.bf16.mxu0 0
    %173 = vmatpush1.bf16.msra.mxu0 0
    %174 = vmatprep.subr.bf16.mxu0 0
    %175 = vmatpush1.bf16.msra.mxu0 0
    %176 = vmatprep.subr.bf16.mxu0 0
    %177 = vmatpush1.bf16.msra.mxu0 0
    %178 = vmatprep.subr.bf16.mxu0 0
    %179 = vmatpush1.bf16.msra.mxu0 0
    %180 = vmatprep.subr.bf16.mxu0 0
    %181 = vmatpush1.bf16.msra.mxu0 0
    %182 = vmatprep.subr.bf16.mxu0 0
    %183 = vmatpush1.bf16.msra.mxu0 0
    %184 = vmatprep.subr.bf16.mxu0 0
    %185 = vmatpush1.bf16.msra.mxu0 0
    %186 = vmatprep.subr.bf16.mxu0 0
    %187 = vmatpush1.bf16.msra.mxu0 0
    %188 = vmatprep.subr.bf16.mxu0 0
    %189 = vmatpush1.bf16.msra.mxu0 0
    %190 = vmatprep.subr.bf16.mxu0 0
    %191 = vmatpush1.bf16.msra.mxu0 0
    %192 = vmatprep.mubr.bf16.mxu0 0
    %193 = vmatmul.mubr.bf16.gmra.mrb[0].mxu0 %v104
    %v194 = vpop.f32.mrb[0].mxu0
    %v195 = vadd.f32 %v88, %v194
    %v196 = vpop.f32.mrb[0].mxu0
    %v197 = vpop.f32.mrb[0].mxu0
    %v198 = vadd.f32 %v88, %v197
    %v199 = vpop.f32.mrb[0].mxu0
    %200 = vmatprep.mubr.bf16.mxu0 0
    %201 = vmatmul.mubr.bf16.gmra.mrb[0].mxu0 %v107
    %v202 = vpop.f32.mrb[0].mxu0
    %v203 = vadd.f32 %v88, %v202
    %v204 = vpop.f32.mrb[0].mxu0
    %v205 = vpop.f32.mrb[0].mxu0
    %v206 = vadd.f32 %v88, %v205
    %v207 = vpop.f32.mrb[0].mxu0
    %208 = vmatprep.mubr.bf16.mxu0 0
    %209 = vmatmul.mubr.bf16.gmra.mrb[0].mxu0 %v110
    %v210 = vpop.f32.mrb[0].mxu0
    %v211 = vadd.f32 %v88, %v210
    %v212 = vpop.f32.mrb[0].mxu0
    %v213 = vpop.f32.mrb[0].mxu0
    %v214 = vadd.f32 %v88, %v213
    %v215 = vpop.f32.mrb[0].mxu0
    %216 = vmatprep.mubr.bf16.mxu0 0
    %217 = vmatmul.mubr.bf16.gmra.mrb[0].mxu0 %v113
    %v218 = vpop.f32.mrb[0].mxu0
    %v219 = vadd.f32 %v88, %v218
    %v220 = vpop.f32.mrb[0].mxu0
    %v221 = vpop.f32.mrb[0].mxu0
    %v222 = vadd.f32 %v88, %v221
    %v223 = vpop.f32.mrb[0].mxu0
    %224 = vmatprep.mubr.bf16.mxu0 0
    %225 = vmatmul.mubr.bf16.gmra.mrb[0].mxu0 %v116
    %v226 = vpop.f32.mrb[0].mxu0
    %v227 = vadd.f32 %v88, %v226
    %v228 = vpop.f32.mrb[0].mxu0
    %v229 = vpop.f32.mrb[0].mxu0
    %v230 = vadd.f32 %v88, %v229
    %v231 = vpop.f32.mrb[0].mxu0
    %232 = vmatprep.mubr.bf16.mxu0 0
    %233 = vmatmul.mubr.bf16.gmra.mrb[0].mxu0 %v119
    %v234 = vpop.f32.mrb[0].mxu0
    %v235 = vadd.f32 %v88, %v234
    %v236 = vpop.f32.mrb[0].mxu0
    %v237 = vpop.f32.mrb[0].mxu0
    %v238 = vadd.f32 %v88, %v237
    %v239 = vpop.f32.mrb[0].mxu0
    %240 = vmatprep.mubr.bf16.mxu0 0
    %241 = vmatmul.mubr.bf16.gmra.mrb[0].mxu0 %v122
    %v242 = vpop.f32.mrb[0].mxu0
    %v243 = vadd.f32 %v88, %v242
    %v244 = vpop.f32.mrb[0].mxu0
    %v245 = vpop.f32.mrb[0].mxu0
    %v246 = vadd.f32 %v88, %v245
    %v247 = vpop.f32.mrb[0].mxu0
    %248 = vmatprep.mubr.bf16.mxu0 0
    %249 = vmatmul.mubr.bf16.gmra.mrb[0].mxu0 %v125
    %v250 = vpop.f32.mrb[0].mxu0
    %v251 = vadd.f32 %v88, %v250
    %v252 = vpop.f32.mrb[0].mxu0
    %v253 = vpop.f32.mrb[0].mxu0
    %v254 = vadd.f32 %v88, %v253
    %v255 = vpop.f32.mrb[0].mxu0
    %256 = vmatprep.mubr.bf16.mxu0 0
    %257 = vmatmul.mubr.bf16.gmra.mrb[0].mxu0 %v128
    %v258 = vpop.f32.mrb[0].mxu0
    %v259 = vadd.f32 %v88, %v258
    %v260 = vpop.f32.mrb[0].mxu0
    %v261 = vpop.f32.mrb[0].mxu0
    %v262 = vadd.f32 %v88, %v261
    %v263 = vpop.f32.mrb[0].mxu0
    %264 = vmatprep.mubr.bf16.mxu0 0
    %265 = vmatmul.mubr.bf16.gmra.mrb[0].mxu0 %v131
    %v266 = vpop.f32.mrb[0].mxu0
    %v267 = vadd.f32 %v88, %v266
    %v268 = vpop.f32.mrb[0].mxu0
    %v269 = vpop.f32.mrb[0].mxu0
    %v270 = vadd.f32 %v88, %v269
    %v271 = vpop.f32.mrb[0].mxu0
    %272 = vmatprep.mubr.bf16.mxu0 0
    %273 = vmatmul.mubr.bf16.gmra.mrb[0].mxu0 %v134
    %v274 = vpop.f32.mrb[0].mxu0
    %v275 = vadd.f32 %v88, %v274
    %v276 = vpop.f32.mrb[0].mxu0
    %v277 = vpop.f32.mrb[0].mxu0
    %v278 = vadd.f32 %v88, %v277
    %v279 = vpop.f32.mrb[0].mxu0
    %280 = vmatprep.mubr.bf16.mxu0 0
    %281 = vmatmul.mubr.bf16.gmra.mrb[0].mxu0 %v137
    %v282 = vpop.f32.mrb[0].mxu0
    %v283 = vadd.f32 %v88, %v282
    %v284 = vpop.f32.mrb[0].mxu0
    %v285 = vpop.f32.mrb[0].mxu0
    %v286 = vadd.f32 %v88, %v285
    %v287 = vpop.f32.mrb[0].mxu0
    %288 = vmatprep.mubr.bf16.mxu0 0
    %289 = vmatmul.mubr.bf16.gmra.mrb[0].mxu0 %v140
    %v290 = vpop.f32.mrb[0].mxu0
    %v291 = vadd.f32 %v88, %v290
    %v292 = vpop.f32.mrb[0].mxu0
    %v293 = vpop.f32.mrb[0].mxu0
    %v294 = vadd.f32 %v88, %v293
    %v295 = vpop.f32.mrb[0].mxu0
    %296 = vmatprep.mubr.bf16.mxu0 0
    %297 = vmatmul.mubr.bf16.gmra.mrb[0].mxu0 %v143
    %v298 = vpop.f32.mrb[0].mxu0
    %v299 = vadd.f32 %v88, %v298
    %v300 = vpop.f32.mrb[0].mxu0
    %v301 = vpop.f32.mrb[0].mxu0
    %v302 = vadd.f32 %v88, %v301
    %v303 = vpop.f32.mrb[0].mxu0
    %304 = vmatprep.mubr.bf16.mxu0 0
    %305 = vmatmul.mubr.bf16.gmra.mrb[0].mxu0 %v146
    %v306 = vpop.f32.mrb[0].mxu0
    %v307 = vadd.f32 %v88, %v306
    %v308 = vpop.f32.mrb[0].mxu0
    %v309 = vpop.f32.mrb[0].mxu0
    %v310 = vadd.f32 %v88, %v309
    %v311 = vpop.f32.mrb[0].mxu0
    %312 = vmatprep.mubr.bf16.mxu0 0
    %313 = vmatmul.mubr.bf16.gmra.mrb[0].mxu0 %v149
    %v314 = vpop.f32.mrb[0].mxu0
    %v315 = vadd.f32 %v88, %v314
    %v316 = vpop.f32.mrb[0].mxu0
    %v317 = vpop.f32.mrb[0].mxu0
    %v318 = vadd.f32 %v88, %v317
    %v319 = vpop.f32.mrb[0].mxu0
    %320 = vmatprep.mubr.bf16.mxu0 0
    %321 = vmatmul.mubr.bf16.gmra.mrb[0].mxu0 %v152
    %v322 = vpop.f32.mrb[0].mxu0
    %v323 = vadd.f32 %v88, %v322
    %v324 = vpop.f32.mrb[0].mxu0
    %v325 = vpop.f32.mrb[0].mxu0
    %v326 = vadd.f32 %v88, %v325
    %v327 = vpop.f32.mrb[0].mxu0
    %328 = vmatprep.mubr.bf16.mxu0 0
    %329 = vmatmul.mubr.bf16.gmra.mrb[0].mxu0 %v155
    %v330 = vpop.f32.mrb[0].mxu0
    %v331 = vadd.f32 %v88, %v330
    %v332 = vpop.f32.mrb[0].mxu0
    %v333 = vpop.f32.mrb[0].mxu0
    %v334 = vadd.f32 %v88, %v333
    %v335 = vpop.f32.mrb[0].mxu0
    %336 = vmatprep.mubr.bf16.mxu0 0
    %337 = vmatmul.mubr.bf16.gmra.mrb[0].mxu0 %v158
    %v338 = vpop.f32.mrb[0].mxu0
    %v339 = vadd.f32 %v88, %v338
    %v340 = vpop.f32.mrb[0].mxu0
    %v341 = vpop.f32.mrb[0].mxu0
    %v342 = vadd.f32 %v88, %v341
    %v343 = vpop.f32.mrb[0].mxu0
    %344 = vdwg.mxu0
    %v345 = vmax.f32 %v195, 0.0
    %v346 = vmax.f32 %v198, 0.0
    %v347 = vmax.f32 %v203, 0.0
    %v348 = vmax.f32 %v206, 0.0
    %v349 = vmax.f32 %v211, 0.0
    %v350 = vmax.f32 %v214, 0.0
    %v351 = vmax.f32 %v219, 0.0
    %v352 = vmax.f32 %v222, 0.0
    %v353 = vmax.f32 %v227, 0.0
    %v354 = vmax.f32 %v230, 0.0
    %v355 = vmax.f32 %v235, 0.0
    %v356 = vmax.f32 %v238, 0.0
    %v357 = vmax.f32 %v243, 0.0
    %v358 = vmax.f32 %v246, 0.0
    %v359 = vmax.f32 %v251, 0.0
    %v360 = vmax.f32 %v254, 0.0
    %v361 = vmax.f32 %v259, 0.0
    %v362 = vmax.f32 %v262, 0.0
    %v363 = vmax.f32 %v267, 0.0
    %v364 = vmax.f32 %v270, 0.0
    %v365 = vmax.f32 %v275, 0.0
    %v366 = vmax.f32 %v278, 0.0
    %v367 = vmax.f32 %v283, 0.0
    %v368 = vmax.f32 %v286, 0.0
    %v369 = vmax.f32 %v291, 0.0
    %v370 = vmax.f32 %v294, 0.0
    %v371 = vmax.f32 %v299, 0.0
    %v372 = vmax.f32 %v302, 0.0
    %v373 = vmax.f32 %v307, 0.0
    %v374 = vmax.f32 %v310, 0.0
    %v375 = vmax.f32 %v315, 0.0
    %v376 = vmax.f32 %v318, 0.0
    %v377 = vmax.f32 %v323, 0.0
    %v378 = vmax.f32 %v326, 0.0
    %v379 = vmax.f32 %v331, 0.0
    %v380 = vmax.f32 %v334, 0.0
    %v381 = vmax.f32 %v339, 0.0
    %v382 = vmax.f32 %v342, 0.0
    %v383 = vpack.c.bf16 %v346, %v345
    %v384 = vpack.c.bf16 %v348, %v347
    %v385 = vpack.c.bf16 %v350, %v349
    %v386 = vpack.c.bf16 %v352, %v351
    %v387 = vpack.c.bf16 %v354, %v353
    %v388 = vpack.c.bf16 %v356, %v355
    %v389 = vpack.c.bf16 %v358, %v357
    %v390 = vpack.c.bf16 %v360, %v359
    %v391 = vpack.c.bf16 %v362, %v361
    %v392 = vpack.c.bf16 %v364, %v363
    %v393 = vpack.c.bf16 %v366, %v365
    %v394 = vpack.c.bf16 %v368, %v367
    %v395 = vpack.c.bf16 %v370, %v369
    %v396 = vpack.c.bf16 %v372, %v371
    %v397 = vpack.c.bf16 %v374, %v373
    %v398 = vpack.c.bf16 %v376, %v375
    %v399 = vpack.c.bf16 %v378, %v377
    %v400 = vpack.c.bf16 %v380, %v379
    %v401 = vpack.c.bf16 %v382, %v381
    %v402 = vld [vmem:[%s3] sm:$0xf]
    %v403 = vld [vmem:[%s3 + $0x4] sm:$0xf]
    %v404 = vld [vmem:[%s3 + $0x8] sm:$0xf]
    %v405 = vld [vmem:[%s3 + $0xc] sm:$0xf]
    %v406 = vld [vmem:[%s3 + $0x10] sm:$0xf]
    %v407 = vld [vmem:[%s3 + $0x14] sm:$0xf]
    %v408 = vld [vmem:[%s3 + $0x18] sm:$0xf]
    %v409 = vld [vmem:[%s3 + $0x1c] sm:$0xf]
    %v410 = vld [vmem:[%s3 + $0x20] sm:$0xf]
    %v411 = vld [vmem:[%s3 + $0x24] sm:$0xf]
    %v412 = vld [vmem:[%s3 + $0x28] sm:$0xf]
    %v413 = vld [vmem:[%s3 + $0x2c] sm:$0xf]
    %v414 = vld [vmem:[%s3 + $0x30] sm:$0xf]
    %v415 = vld [vmem:[%s3 + $0x34] sm:$0xf]
    %v416 = vld [vmem:[%s3 + $0x38] sm:$0xf]
    %v417 = vld [vmem:[%s3 + $0x3c] sm:$0xf]
    %v418 = vld [vmem:[%s4] sm:$0x1]
    %v420 = vlaneseq
    %v421 = vshrl.u32 %v420, 7
    %v422 = vsub.s32 0, %v421
    %v423 = vrot.slane %v418, %v422
    %v441 = vunpack.c.l.b16 %v402
    %v442 = vunpack.c.l.b16 %v403
    %v443 = vunpack.c.l.b16 %v404
    %v444 = vunpack.c.l.b16 %v405
    %v445 = vunpack.c.l.b16 %v406
    %v446 = vunpack.c.l.b16 %v407
    %v447 = vunpack.c.l.b16 %v408
    %v448 = vunpack.c.l.b16 %v409
    %v449 = vunpack.c.l.b16 %v410
    %v450 = vunpack.c.l.b16 %v411
    %v451 = vunpack.c.l.b16 %v412
    %v452 = vunpack.c.l.b16 %v413
    %v453 = vunpack.c.l.b16 %v414
    %v454 = vunpack.c.l.b16 %v415
    %v455 = vunpack.c.l.b16 %v416
    %v456 = vunpack.c.l.b16 %v417
    %v457 = vpack.c.b16 %v442, %v441
    %v458 = vpack.c.b16 %v444, %v443
    %v459 = vpack.c.b16 %v446, %v445
    %v460 = vpack.c.b16 %v448, %v447
    %v461 = vpack.c.b16 %v450, %v449
    %v462 = vpack.c.b16 %v452, %v451
    %v463 = vpack.c.b16 %v454, %v453
    %v464 = vpack.c.b16 %v456, %v455
    %473 = vmatprep.subr.bf16.mxu0 0
    %474 = vmatpush1.bf16.msra.mxu0 %v457
    %475 = vmatprep.subr.bf16.mxu0 0
    %476 = vmatpush1.bf16.msra.mxu0 %v458
    %477 = vmatprep.subr.bf16.mxu0 0
    %478 = vmatpush1.bf16.msra.mxu0 %v459
    %479 = vmatprep.subr.bf16.mxu0 0
    %480 = vmatpush1.bf16.msra.mxu0 %v460
    %481 = vmatprep.subr.bf16.mxu0 0
    %482 = vmatpush1.bf16.msra.mxu0 %v461
    %483 = vmatprep.subr.bf16.mxu0 0
    %484 = vmatpush1.bf16.msra.mxu0 %v462
    %485 = vmatprep.subr.bf16.mxu0 0
    %486 = vmatpush1.bf16.msra.mxu0 %v463
    %487 = vmatprep.subr.bf16.mxu0 0
    %488 = vmatpush1.bf16.msra.mxu0 %v464
    %489 = vmatprep.subr.bf16.mxu0 0
    %490 = vmatpush1.bf16.msra.mxu0 0
    %491 = vmatprep.subr.bf16.mxu0 0
    %492 = vmatpush1.bf16.msra.mxu0 0
    %493 = vmatprep.subr.bf16.mxu0 0
    %494 = vmatpush1.bf16.msra.mxu0 0
    %495 = vmatprep.subr.bf16.mxu0 0
    %496 = vmatpush1.bf16.msra.mxu0 0
    %497 = vmatprep.subr.bf16.mxu0 0
    %498 = vmatpush1.bf16.msra.mxu0 0
    %499 = vmatprep.subr.bf16.mxu0 0
    %500 = vmatpush1.bf16.msra.mxu0 0
    %501 = vmatprep.subr.bf16.mxu0 0
    %502 = vmatpush1.bf16.msra.mxu0 0
    %503 = vmatprep.subr.bf16.mxu0 0
    %504 = vmatpush1.bf16.msra.mxu0 0
    %505 = vmatprep.mubr.bf16.mxu0 0
    %506 = vmatmul.mubr.bf16.gmra.mrb[0].mxu0 %v383
    %v507 = vpop.f32.mrb[0].mxu0
    %v508 = vadd.f32 %v423, %v507
    %v509 = vpop.f32.mrb[0].mxu0
    %v510 = vpop.f32.mrb[0].mxu0
    %v511 = vadd.f32 %v423, %v510
    %v512 = vpop.f32.mrb[0].mxu0
    %513 = vmatprep.mubr.bf16.mxu0 0
    %514 = vmatmul.mubr.bf16.gmra.mrb[0].mxu0 %v384
    %v515 = vpop.f32.mrb[0].mxu0
    %v516 = vadd.f32 %v423, %v515
    %v517 = vpop.f32.mrb[0].mxu0
    %v518 = vpop.f32.mrb[0].mxu0
    %v519 = vadd.f32 %v423, %v518
    %v520 = vpop.f32.mrb[0].mxu0
    %521 = vmatprep.mubr.bf16.mxu0 0
    %522 = vmatmul.mubr.bf16.gmra.mrb[0].mxu0 %v385
    %v523 = vpop.f32.mrb[0].mxu0
    %v524 = vadd.f32 %v423, %v523
    %v525 = vpop.f32.mrb[0].mxu0
    %v526 = vpop.f32.mrb[0].mxu0
    %v527 = vadd.f32 %v423, %v526
    %v528 = vpop.f32.mrb[0].mxu0
    %529 = vmatprep.mubr.bf16.mxu0 0
    %530 = vmatmul.mubr.bf16.gmra.mrb[0].mxu0 %v386
    %v531 = vpop.f32.mrb[0].mxu0
    %v532 = vadd.f32 %v423, %v531
    %v533 = vpop.f32.mrb[0].mxu0
    %v534 = vpop.f32.mrb[0].mxu0
    %v535 = vadd.f32 %v423, %v534
    %v536 = vpop.f32.mrb[0].mxu0
    %537 = vmatprep.mubr.bf16.mxu0 0
    %538 = vmatmul.mubr.bf16.gmra.mrb[0].mxu0 %v387
    %v539 = vpop.f32.mrb[0].mxu0
    %v540 = vadd.f32 %v423, %v539
    %v541 = vpop.f32.mrb[0].mxu0
    %v542 = vpop.f32.mrb[0].mxu0
    %v543 = vadd.f32 %v423, %v542
    %v544 = vpop.f32.mrb[0].mxu0
    %545 = vmatprep.mubr.bf16.mxu0 0
    %546 = vmatmul.mubr.bf16.gmra.mrb[0].mxu0 %v388
    %v547 = vpop.f32.mrb[0].mxu0
    %v548 = vadd.f32 %v423, %v547
    %v549 = vpop.f32.mrb[0].mxu0
    %v550 = vpop.f32.mrb[0].mxu0
    %v551 = vadd.f32 %v423, %v550
    %v552 = vpop.f32.mrb[0].mxu0
    %553 = vmatprep.mubr.bf16.mxu0 0
    %554 = vmatmul.mubr.bf16.gmra.mrb[0].mxu0 %v389
    %v555 = vpop.f32.mrb[0].mxu0
    %v556 = vadd.f32 %v423, %v555
    %v557 = vpop.f32.mrb[0].mxu0
    %v558 = vpop.f32.mrb[0].mxu0
    %v559 = vadd.f32 %v423, %v558
    %v560 = vpop.f32.mrb[0].mxu0
    %561 = vmatprep.mubr.bf16.mxu0 0
    %562 = vmatmul.mubr.bf16.gmra.mrb[0].mxu0 %v390
    %v563 = vpop.f32.mrb[0].mxu0
    %v564 = vadd.f32 %v423, %v563
    %v565 = vpop.f32.mrb[0].mxu0
    %v566 = vpop.f32.mrb[0].mxu0
    %v567 = vadd.f32 %v423, %v566
    %v568 = vpop.f32.mrb[0].mxu0
    %569 = vmatprep.mubr.bf16.mxu0 0
    %570 = vmatmul.mubr.bf16.gmra.mrb[0].mxu0 %v391
    %v571 = vpop.f32.mrb[0].mxu0
    %v572 = vadd.f32 %v423, %v571
    %v573 = vpop.f32.mrb[0].mxu0
    %v574 = vpop.f32.mrb[0].mxu0
    %v575 = vadd.f32 %v423, %v574
    %v576 = vpop.f32.mrb[0].mxu0
    %577 = vmatprep.mubr.bf16.mxu0 0
    %578 = vmatmul.mubr.bf16.gmra.mrb[0].mxu0 %v392
    %v579 = vpop.f32.mrb[0].mxu0
    %v580 = vadd.f32 %v423, %v579
    %v581 = vpop.f32.mrb[0].mxu0
    %v582 = vpop.f32.mrb[0].mxu0
    %v583 = vadd.f32 %v423, %v582
    %v584 = vpop.f32.mrb[0].mxu0
    %585 = vmatprep.mubr.bf16.mxu0 0
    %586 = vmatmul.mubr.bf16.gmra.mrb[0].mxu0 %v393
    %v587 = vpop.f32.mrb[0].mxu0
    %v588 = vadd.f32 %v423, %v587
    %v589 = vpop.f32.mrb[0].mxu0
    %v590 = vpop.f32.mrb[0].mxu0
    %v591 = vadd.f32 %v423, %v590
    %v592 = vpop.f32.mrb[0].mxu0
    %593 = vmatprep.mubr.bf16.mxu0 0
    %594 = vmatmul.mubr.bf16.gmra.mrb[0].mxu0 %v394
    %v595 = vpop.f32.mrb[0].mxu0
    %v596 = vadd.f32 %v423, %v595
    %v597 = vpop.f32.mrb[0].mxu0
    %v598 = vpop.f32.mrb[0].mxu0
    %v599 = vadd.f32 %v423, %v598
    %v600 = vpop.f32.mrb[0].mxu0
    %601 = vmatprep.mubr.bf16.mxu0 0
    %602 = vmatmul.mubr.bf16.gmra.mrb[0].mxu0 %v395
    %v603 = vpop.f32.mrb[0].mxu0
    %v604 = vadd.f32 %v423, %v603
    %v605 = vpop.f32.mrb[0].mxu0
    %v606 = vpop.f32.mrb[0].mxu0
    %v607 = vadd.f32 %v423, %v606
    %v608 = vpop.f32.mrb[0].mxu0
    %609 = vmatprep.mubr.bf16.mxu0 0
    %610 = vmatmul.mubr.bf16.gmra.mrb[0].mxu0 %v396
    %v611 = vpop.f32.mrb[0].mxu0
    %v612 = vadd.f32 %v423, %v611
    %v613 = vpop.f32.mrb[0].mxu0
    %v614 = vpop.f32.mrb[0].mxu0
    %v615 = vadd.f32 %v423, %v614
    %v616 = vpop.f32.mrb[0].mxu0
    %617 = vmatprep.mubr.bf16.mxu0 0
    %618 = vmatmul.mubr.bf16.gmra.mrb[0].mxu0 %v397
    %v619 = vpop.f32.mrb[0].mxu0
    %v620 = vadd.f32 %v423, %v619
    %v621 = vpop.f32.mrb[0].mxu0
    %v622 = vpop.f32.mrb[0].mxu0
    %v623 = vadd.f32 %v423, %v622
    %v624 = vpop.f32.mrb[0].mxu0
    %625 = vmatprep.mubr.bf16.mxu0 0
    %626 = vmatmul.mubr.bf16.gmra.mrb[0].mxu0 %v398
    %v627 = vpop.f32.mrb[0].mxu0
    %v628 = vadd.f32 %v423, %v627
    %v629 = vpop.f32.mrb[0].mxu0
    %v630 = vpop.f32.mrb[0].mxu0
    %v631 = vadd.f32 %v423, %v630
    %v632 = vpop.f32.mrb[0].mxu0
    %633 = vmatprep.mubr.bf16.mxu0 0
    %634 = vmatmul.mubr.bf16.gmra.mrb[0].mxu0 %v399
    %v635 = vpop.f32.mrb[0].mxu0
    %v636 = vadd.f32 %v423, %v635
    %v637 = vpop.f32.mrb[0].mxu0
    %v638 = vpop.f32.mrb[0].mxu0
    %v639 = vadd.f32 %v423, %v638
    %v640 = vpop.f32.mrb[0].mxu0
    %641 = vmatprep.mubr.bf16.mxu0 0
    %642 = vmatmul.mubr.bf16.gmra.mrb[0].mxu0 %v400
    %v643 = vpop.f32.mrb[0].mxu0
    %v644 = vadd.f32 %v423, %v643
    %v645 = vpop.f32.mrb[0].mxu0
    %v646 = vpop.f32.mrb[0].mxu0
    %v647 = vadd.f32 %v423, %v646
    %v648 = vpop.f32.mrb[0].mxu0
    %649 = vmatprep.mubr.bf16.mxu0 0
    %650 = vmatmul.mubr.bf16.gmra.mrb[0].mxu0 %v401
    %v651 = vpop.f32.mrb[0].mxu0
    %v652 = vadd.f32 %v423, %v651
    %v653 = vpop.f32.mrb[0].mxu0
    %v654 = vpop.f32.mrb[0].mxu0
    %v655 = vadd.f32 %v423, %v654
    %v656 = vpop.f32.mrb[0].mxu0
    %657 = vdwg.mxu0
    %658 = vst [vmem:[#allocation2] sm:$0xff] %v508
    %659 = vst [vmem:[#allocation2 + $0x8] sm:$0xff] %v511
    %660 = vst [vmem:[#allocation2 + $0x10] sm:$0xff] %v516
    %661 = vst [vmem:[#allocation2 + $0x18] sm:$0xff] %v519
    %662 = vst [vmem:[#allocation2 + $0x20] sm:$0xff] %v524
    %663 = vst [vmem:[#allocation2 + $0x28] sm:$0xff] %v527
    %664 = vst [vmem:[#allocation2 + $0x30] sm:$0xff] %v532
    %665 = vst [vmem:[#allocation2 + $0x38] sm:$0xff] %v535
    %666 = vst [vmem:[#allocation2 + $0x40] sm:$0xff] %v540
    %667 = vst [vmem:[#allocation2 + $0x48] sm:$0xff] %v543
    %668 = vst [vmem:[#allocation2 + $0x50] sm:$0xff] %v548
    %669 = vst [vmem:[#allocation2 + $0x58] sm:$0xff] %v551
    %670 = vst [vmem:[#allocation2 + $0x60] sm:$0xff] %v556
    %671 = vst [vmem:[#allocation2 + $0x68] sm:$0xff] %v559
    %672 = vst [vmem:[#allocation2 + $0x70] sm:$0xff] %v564
    %673 = vst [vmem:[#allocation2 + $0x78] sm:$0xff] %v567
    %674 = vst [vmem:[#allocation2 + $0x80] sm:$0xff] %v572
    %675 = vst [vmem:[#allocation2 + $0x88] sm:$0xff] %v575
    %676 = vst [vmem:[#allocation2 + $0x90] sm:$0xff] %v580
    %677 = vst [vmem:[#allocation2 + $0x98] sm:$0xff] %v583
    %678 = vst [vmem:[#allocation2 + $0xa0] sm:$0xff] %v588
    %679 = vst [vmem:[#allocation2 + $0xa8] sm:$0xff] %v591
    %680 = vst [vmem:[#allocation2 + $0xb0] sm:$0xff] %v596
    %681 = vst [vmem:[#allocation2 + $0xb8] sm:$0xff] %v599
    %682 = vst [vmem:[#allocation2 + $0xc0] sm:$0xff] %v604
    %683 = vst [vmem:[#allocation2 + $0xc8] sm:$0xff] %v607
    %684 = vst [vmem:[#allocation2 + $0xd0] sm:$0xff] %v612
    %685 = vst [vmem:[#allocation2 + $0xd8] sm:$0xff] %v615
    %686 = vst [vmem:[#allocation2 + $0xe0] sm:$0xff] %v620
    %687 = vst [vmem:[#allocation2 + $0xe8] sm:$0xff] %v623
    %688 = vst [vmem:[#allocation2 + $0xf0] sm:$0xff] %v628
    %689 = vst [vmem:[#allocation2 + $0xf8] sm:$0xff] %v631
    %690 = vst [vmem:[#allocation2 + $0x100] sm:$0xff] %v636
    %691 = vst [vmem:[#allocation2 + $0x108] sm:$0xff] %v639
    %692 = vst [vmem:[#allocation2 + $0x110] sm:$0xff] %v644
    %693 = vst [vmem:[#allocation2 + $0x118] sm:$0xff] %v647
    %694 = vst [vmem:[#allocation2 + $0x120] sm:$0xff] %v652
    %695 = vst [vmem:[#allocation2 + $0x128] sm:$0xff] %v655
    // Predicated region
    $region22: #{tpu_custom_call.1} parent=1 // pred_check
      _
    $region23: #{tpu_custom_call.1} parent=1 // pred_check_branch
      %697 = sbr.rel (0) target = $region25
    $region24: #{tpu_custom_call.1} parent=1 // pred_region
      %s699 = ssub.s32 4864, 4864
      %700 = vsyncadd [#allocation3], %s699
      %s701 = sshll.u32 [#allocation2], 4
      %s702 = int_to_ptr.vmem [resolvable:$true] %s701
      %707 = dma.vmem_to_hbm [thread:$0]  %s702, 4864, %s5, [#allocation3], 128, 128, 8
    $region25: #{tpu_custom_call.1} parent=1 // pred_fallthru
      _
    // Predicated region
    $region26: #{tpu_custom_call.1} parent=1 // pred_check
      _
    $region27: #{tpu_custom_call.1} parent=1 // pred_check_branch
      %709 = sbr.rel (0) target = $region29
    $region28: #{tpu_custom_call.1} parent=1 // pred_region
      %710 = dma.done [#allocation3], 4864
    $region29: #{tpu_custom_call.1} parent=1 // pred_fallthru
      _
    %711 = vsyncpa [#allocation3], 1

</llo_original>
